<compile_context>
chip_gen: v6e
topology: v6e:2x2x1
jax: 0.10.0
libtpu: 0.0.40
codegen_flags: <defaults>
</compile_context>

<pallas_src>
import functools

import jax
import jax.numpy as jnp
from jax.experimental import pallas as pl
from jax.experimental.pallas import tpu as pltpu

LANE = 128     # TPU lane width (last dim of every vreg / MXU pass)
SUBLANE = 8    # f32 sublane width


def _round_up(n, m):
    return ((n + m - 1) // m) * m


def mlp_kernel(x_ref, w1_ref, w2_ref, w3_ref, o_ref):
    """Fused 3-layer bias-free MLP: y = tanh(tanh(tanh(x@W1)@W2)@W3).

    Matmul operands stay in the (possibly bf16) input dtype for the fast MXU
    path, accumulation is f32 via preferred_element_type, and tanh runs in f32
    (EUP slot, free under the MXU). Intermediates h1/h2 never leave vregs.
    """
    h1 = jnp.tanh(jnp.dot(x_ref[...], w1_ref[...],
                          preferred_element_type=jnp.float32))
    h2 = jnp.tanh(jnp.dot(h1.astype(w2_ref.dtype), w2_ref[...],
                          preferred_element_type=jnp.float32))
    y = jnp.tanh(jnp.dot(h2.astype(w3_ref.dtype), w3_ref[...],
                         preferred_element_type=jnp.float32))
    o_ref[...] = y.astype(o_ref.dtype)


@functools.partial(jax.jit, static_argnames=("block_batch", "compute_dtype"))
def net_forward(x, w1, w2, w3, *, block_batch=512, compute_dtype=jnp.bfloat16):
    """3-layer bias-free MLP with tanh activations, fused in one Pallas kernel.

    x:  (B, F)
    w1: (F, H1), w2: (H1, H2), w3: (H2, O)   (already transposed vs. PyTorch)
    Returns (B, O) float32.
    """
    B, F = x.shape
    H1 = w1.shape[1]
    H2 = w2.shape[1]
    O = w3.shape[1]

    # Lane-pad every feature dim to 128 so vregs / MXU passes are dense and the
    # output store is a full-lane (unmasked) vst.
    Fp, H1p, H2p, Op = (_round_up(d, LANE) for d in (F, H1, H2, O))

    # Batch tile: multiple of the sublane width, a multiple of 128 once B is
    # large, and capped at block_batch so double-buffered x/o tiles plus the
    # resident weights stay far below the 32 MiB scoped VMEM default (v7x only
    # has 64 MiB physical VMEM).
    TB = min(block_batch, _round_up(B, SUBLANE))
    Bp = _round_up(B, TB)

    cdt = jnp.dtype(compute_dtype)
    xp = jnp.zeros((Bp, Fp), cdt).at[:B, :F].set(x.astype(cdt))
    w1p = jnp.zeros((Fp, H1p), cdt).at[:F, :H1].set(w1.astype(cdt))
    w2p = jnp.zeros((H1p, H2p), cdt).at[:H1, :H2].set(w2.astype(cdt))
    w3p = jnp.zeros((H2p, Op), cdt).at[:H2, :O].set(w3.astype(cdt))

    grid = (Bp // TB,)

    out = pl.pallas_call(
        mlp_kernel,
        out_shape=jax.ShapeDtypeStruct((Bp, Op), jnp.float32),
        grid_spec=pltpu.PrefetchScalarGridSpec(
            num_scalar_prefetch=0,
            grid=grid,
            in_specs=[
                # x: one batch tile per grid step (double-buffered by Pallas).
                pl.BlockSpec((TB, Fp), lambda i: (i, 0),
                             memory_space=pltpu.MemorySpace.VMEM),
                # Weights: same block every step -> stay VMEM-resident.
                pl.BlockSpec((Fp, H1p), lambda i: (0, 0),
                             memory_space=pltpu.MemorySpace.VMEM),
                pl.BlockSpec((H1p, H2p), lambda i: (0, 0),
                             memory_space=pltpu.MemorySpace.VMEM),
                pl.BlockSpec((H2p, Op), lambda i: (0, 0),
                             memory_space=pltpu.MemorySpace.VMEM),
            ],
            out_specs=pl.BlockSpec((TB, Op), lambda i: (i, 0),
                                   memory_space=pltpu.MemorySpace.VMEM),
        ),
        compiler_params=pltpu.CompilerParams(
            # Batch tiles are independent -> shard across v7x's 2 TensorCores.
            dimension_semantics=("parallel",),
            # Explicit budget; actual usage is a small fraction of this on
            # v5e/v6e/v7x, so double-buffering always stays alive.
            vmem_limit_bytes=32 * 1024 * 1024,
        ),
    )(xp, w1p, w2p, w3p)

    # Slice away batch/lane padding (padded lanes are exactly tanh(0) = 0).
    return out[:B, :O]


def init_params(key, n_feature, n_hidden1, n_hidden2, n_output):
    """Deterministic init mimicking nn.Linear default: U(-1/sqrt(fan_in), +1/sqrt(fan_in)).

    Weights are stored pre-transposed as (in, out).
    """
    k1, k2, k3 = jax.random.split(key, 3)

    def linear_w(k, fan_in, fan_out):
        bound = 1.0 / jnp.sqrt(jnp.float32(fan_in))
        return jax.random.uniform(k, (fan_in, fan_out), jnp.float32,
                                  minval=-bound, maxval=bound)

    w1 = linear_w(k1, n_feature, n_hidden1)
    w2 = linear_w(k2, n_hidden1, n_hidden2)
    w3 = linear_w(k3, n_hidden2, n_output)
    return w1, w2, w3


if __name__ == "__main__":
    # Small shapes consistent with the module's forward: (batch, n_feature) input.
    batch = 8
    n_feature, n_hidden1, n_hidden2, n_output = 16, 32, 32, 8

    key = jax.random.PRNGKey(0)
    kx, kp = jax.random.split(key)
    x = jax.random.normal(kx, (batch, n_feature), jnp.float32)
    w1, w2, w3 = init_params(kp, n_feature, n_hidden1, n_hidden2, n_output)

    # Pure-JAX reference (same math as the PyTorch forward, f32 throughout).
    ref = jnp.tanh(jnp.tanh(jnp.tanh(x @ w1) @ w2) @ w3)

    # 1) f32 compute path: must match the f32 reference tightly.
    out_f32 = jax.block_until_ready(
        net_forward(x, w1, w2, w3, compute_dtype=jnp.float32))
    assert out_f32.shape == (batch, n_output)
    assert jnp.allclose(out_f32, ref, atol=1e-5, rtol=1e-5)

    # 2) Default bf16-operand MXU fast path (f32 accumulation): loose tolerance
    #    only accounts for bf16 rounding of operands.
    out_bf16 = jax.block_until_ready(net_forward(x, w1, w2, w3))
    assert out_bf16.shape == (batch, n_output)
    assert jnp.allclose(out_bf16, ref, atol=3e-2, rtol=3e-2)

    print("KERNEL_OK")
</pallas_src>

<mosaic_0001>
module attributes {stable_mosaic.version = 11 : i64} {
  func.func @mlp_kernel(%arg0: i32, %arg1: memref<8x128xf32, #tpu.memory_space<vmem>>, %arg2: memref<128x128xf32, #tpu.memory_space<vmem>>, %arg3: memref<128x128xf32, #tpu.memory_space<vmem>>, %arg4: memref<128x128xf32, #tpu.memory_space<vmem>>, %arg5: memref<8x128xf32, #tpu.memory_space<vmem>>) attributes {dimension_semantics = [#tpu.dimension_semantics<parallel>], iteration_bounds = array<i64: 1>, scalar_prefetch = 0 : i64, scratch_operands = 0 : i64, tpu.core_type = #tpu.core_type<tc>, window_params = [{transform_indices = @transform_0, window_bounds = array<i64: 8, 128>}, {pipeline_mode = #tpu.pipeline_mode<synchronous>, transform_indices = @transform_1, window_bounds = array<i64: 128, 128>}, {pipeline_mode = #tpu.pipeline_mode<synchronous>, transform_indices = @transform_2, window_bounds = array<i64: 128, 128>}, {pipeline_mode = #tpu.pipeline_mode<synchronous>, transform_indices = @transform_3, window_bounds = array<i64: 128, 128>}, {transform_indices = @transform_4, window_bounds = array<i64: 8, 128>}]} {
    %c0 = arith.constant 0 : index
    %c0_0 = arith.constant 0 : index
    %0 = vector.load %arg1[%c0, %c0_0] : memref<8x128xf32, #tpu.memory_space<vmem>>, vector<8x128xf32>
    %c0_1 = arith.constant 0 : index
    %c0_2 = arith.constant 0 : index
    %1 = vector.load %arg2[%c0_1, %c0_2] : memref<128x128xf32, #tpu.memory_space<vmem>>, vector<128x128xf32>
    %cst = arith.constant dense<0.000000e+00> : vector<8x128xf32>
    %2 = tpu.matmul %0, %1, %cst {dimension_numbers = #tpu.dot_dimension_numbers<[1], [0], [0], [1], [0, 0, 1, 1], [], []>} : vector<8x128xf32>, vector<128x128xf32>, vector<8x128xf32> -> vector<8x128xf32>
    %3 = math.tanh %2 : vector<8x128xf32>
    %c0_3 = arith.constant 0 : index
    %c0_4 = arith.constant 0 : index
    %4 = vector.load %arg3[%c0_3, %c0_4] : memref<128x128xf32, #tpu.memory_space<vmem>>, vector<128x128xf32>
    %cst_5 = arith.constant dense<0.000000e+00> : vector<8x128xf32>
    %5 = tpu.matmul %3, %4, %cst_5 {dimension_numbers = #tpu.dot_dimension_numbers<[1], [0], [0], [1], [0, 0, 1, 1], [], []>} : vector<8x128xf32>, vector<128x128xf32>, vector<8x128xf32> -> vector<8x128xf32>
    %6 = math.tanh %5 : vector<8x128xf32>
    %c0_6 = arith.constant 0 : index
    %c0_7 = arith.constant 0 : index
    %7 = vector.load %arg4[%c0_6, %c0_7] : memref<128x128xf32, #tpu.memory_space<vmem>>, vector<128x128xf32>
    %cst_8 = arith.constant dense<0.000000e+00> : vector<8x128xf32>
    %8 = tpu.matmul %6, %7, %cst_8 {dimension_numbers = #tpu.dot_dimension_numbers<[1], [0], [0], [1], [0, 0, 1, 1], [], []>} : vector<8x128xf32>, vector<128x128xf32>, vector<8x128xf32> -> vector<8x128xf32>
    %9 = math.tanh %8 : vector<8x128xf32>
    %c0_9 = arith.constant 0 : index
    %c0_10 = arith.constant 0 : index
    %10 = vector.load %arg5[%c0_9, %c0_10] : memref<8x128xf32, #tpu.memory_space<vmem>>, vector<8x128xf32>
    tpu.vector_store %arg5[%c0_9, %c0_10], %9 {strides = array<i32>} : memref<8x128xf32, #tpu.memory_space<vmem>>, vector<8x128xf32>,
    return
  }
  func.func @transform_0(%arg0: i32) -> (i32, i32) {
    %c0_i32 = arith.constant 0 : i32
    %c0_i32_0 = arith.constant 0 : i32
    return %arg0, %c0_i32 : i32, i32
  }
  func.func @transform_1(%arg0: i32) -> (i32, i32) {
    %c0_i32 = arith.constant 0 : i32
    %c0_i32_0 = arith.constant 0 : i32
    %c0_i32_1 = arith.constant 0 : i32
    return %c0_i32, %c0_i32_0 : i32, i32
  }
  func.func @transform_2(%arg0: i32) -> (i32, i32) {
    %c0_i32 = arith.constant 0 : i32
    %c0_i32_0 = arith.constant 0 : i32
    %c0_i32_1 = arith.constant 0 : i32
    return %c0_i32, %c0_i32_0 : i32, i32
  }
  func.func @transform_3(%arg0: i32) -> (i32, i32) {
    %c0_i32 = arith.constant 0 : i32
    %c0_i32_0 = arith.constant 0 : i32
    %c0_i32_1 = arith.constant 0 : i32
    return %c0_i32, %c0_i32_0 : i32, i32
  }
  func.func @transform_4(%arg0: i32) -> (i32, i32) {
    %c0_i32 = arith.constant 0 : i32
    %c0_i32_0 = arith.constant 0 : i32
    return %arg0, %c0_i32 : i32, i32
  }
}

</mosaic_0001>

<llo_original>
// kernel: net_forward.1
$region0: #{net_forward.1}
  #allocation0 [shape = 'u32[]', space=smem, size = 0x4, offset = 0x4, fixed_abs, tag = 'smem constant byte address 0x4 - core index']
  #allocation1 [shape = 'u32[144,128]{1,0:T(1,128)}', space=vmem, size = 0x12000, scoped, tag = 'internal scratch']
  %s0 = inlined_call_operand.vmem [shape: f32[8,128], index: 0, kind: input, shape index: {}]
  %s1 = inlined_call_operand.vmem [shape: f32[128,128], index: 1, kind: input, shape index: {}]
  %s2 = inlined_call_operand.vmem [shape: f32[128,128], index: 2, kind: input, shape index: {}]
  %s3 = inlined_call_operand.vmem [shape: f32[128,128], index: 3, kind: input, shape index: {}]
  %s4 = inlined_call_operand.hbm [shape: f32[8,128], index: 4, kind: output, shape index: {}]
  %s5 = sld [smem:[#allocation0]]
  $region26: #{net_forward.1} parent=0
    _
  %s7 = ssub.s32 1, %s5
  %s8 = scalar_select 0, %s7, %s5
  $region1: #{net_forward.1} parent=0
    #allocation2 [shape = 'u8[4096]{0}', space=vmem, size = 0x1000, scoped, tag = 'output window, operand 0, single buffered']
    #allocation3 [shape = 's32[1]{0}', space=sflag, size = 0x4, scoped, tag = 'scoped memory for net_forward.1']
    %9 = vsyncpa [#allocation3], 0
    // Predicated region
    $region2: #{net_forward.1} parent=1 // pred_check
      _
    $region3: #{net_forward.1} parent=1 // pred_check_branch
      %11 = sbr.rel (0) target = $region5
    $region4: #{net_forward.1} parent=1 // pred_region
      _
    $region5: #{net_forward.1} parent=1 // pred_fallthru
      _
    // Predicated region
    $region6: #{net_forward.1} parent=1 // pred_check
      _
    $region7: #{net_forward.1} parent=1 // pred_check_branch
      %13 = sbr.rel (0) target = $region9
    $region8: #{net_forward.1} parent=1 // pred_region
      _
    $region9: #{net_forward.1} parent=1 // pred_fallthru
      _
    // Predicated region
    $region10: #{net_forward.1} parent=1 // pred_check
      _
    $region11: #{net_forward.1} parent=1 // pred_check_branch
      %15 = sbr.rel (0) target = $region13
    $region12: #{net_forward.1} parent=1 // pred_region
      _
    $region13: #{net_forward.1} parent=1 // pred_fallthru
      _
    // Predicated region
    $region14: #{net_forward.1} parent=1 // pred_check
      _
    $region15: #{net_forward.1} parent=1 // pred_check_branch
      %17 = sbr.rel (0) target = $region17
    $region16: #{net_forward.1} parent=1 // pred_region
      _
    $region17: #{net_forward.1} parent=1 // pred_fallthru
      _
    %v18 = vld [vmem:[%s0] sm:$0xff]
    %v19 = vld [vmem:[%s1] sm:$0xff]
    %v20 = vld [vmem:[%s1 + $0x8] sm:$0xff]
    %v21 = vld [vmem:[%s1 + $0x10] sm:$0xff]
    %v22 = vld [vmem:[%s1 + $0x18] sm:$0xff]
    %v23 = vld [vmem:[%s1 + $0x20] sm:$0xff]
    %v24 = vld [vmem:[%s1 + $0x28] sm:$0xff]
    %v25 = vld [vmem:[%s1 + $0x30] sm:$0xff]
    %v26 = vld [vmem:[%s1 + $0x38] sm:$0xff]
    %v27 = vld [vmem:[%s1 + $0x40] sm:$0xff]
    %v28 = vld [vmem:[%s1 + $0x48] sm:$0xff]
    %v29 = vld [vmem:[%s1 + $0x50] sm:$0xff]
    %v30 = vld [vmem:[%s1 + $0x58] sm:$0xff]
    %v31 = vld [vmem:[%s1 + $0x60] sm:$0xff]
    %v32 = vld [vmem:[%s1 + $0x68] sm:$0xff]
    %v33 = vld [vmem:[%s1 + $0x70] sm:$0xff]
    %v34 = vld [vmem:[%s1 + $0x78] sm:$0xff]
    %35 = vmatprep.subr.mxu0 0.0
    %36 = vmatpush1.msra.mxu0 %v34
    %37 = vmatprep.subr.mxu0 0.0
    %38 = vmatpush1.msra.mxu0 %v33
    %39 = vmatprep.subr.mxu0 0.0
    %40 = vmatpush1.msra.mxu0 %v32
    %41 = vmatprep.subr.mxu0 0.0
    %42 = vmatpush1.msra.mxu0 %v31
    %43 = vmatprep.subr.mxu0 0.0
    %44 = vmatpush1.msra.mxu0 %v30
    %45 = vmatprep.subr.mxu0 0.0
    %46 = vmatpush1.msra.mxu0 %v29
    %47 = vmatprep.subr.mxu0 0.0
    %48 = vmatpush1.msra.mxu0 %v28
    %49 = vmatprep.subr.mxu0 0.0
    %50 = vmatpush1.msra.mxu0 %v27
    %51 = vmatprep.subr.mxu0 0.0
    %52 = vmatpush1.msra.mxu0 %v26
    %53 = vmatprep.subr.mxu0 0.0
    %54 = vmatpush1.msra.mxu0 %v25
    %55 = vmatprep.subr.mxu0 0.0
    %56 = vmatpush1.msra.mxu0 %v24
    %57 = vmatprep.subr.mxu0 0.0
    %58 = vmatpush1.msra.mxu0 %v23
    %59 = vmatprep.subr.mxu0 0.0
    %60 = vmatpush1.msra.mxu0 %v22
    %61 = vmatprep.subr.mxu0 0.0
    %62 = vmatpush1.msra.mxu0 %v21
    %63 = vmatprep.subr.mxu0 0.0
    %64 = vmatpush1.msra.mxu0 %v20
    %65 = vmatprep.subr.mxu0 0.0
    %66 = vmatpush1.msra.mxu0 %v19
    %67 = vmatprep.subr.mxu0 0.0
    %68 = vmatpush2.msra.mxu0 0.0
    %69 = vmatprep.subr.mxu0 0.0
    %70 = vmatpush2.msra.mxu0 0.0
    %71 = vmatprep.subr.mxu0 0.0
    %72 = vmatpush2.msra.mxu0 0.0
    %73 = vmatprep.subr.mxu0 0.0
    %74 = vmatpush2.msra.mxu0 0.0
    %75 = vmatprep.subr.mxu0 0.0
    %76 = vmatpush2.msra.mxu0 0.0
    %77 = vmatprep.subr.mxu0 0.0
    %78 = vmatpush2.msra.mxu0 0.0
    %79 = vmatprep.subr.mxu0 0.0
    %80 = vmatpush2.msra.mxu0 0.0
    %81 = vmatprep.subr.mxu0 0.0
    %82 = vmatpush2.msra.mxu0 0.0
    %83 = vmatprep.subr.mxu0 0.0
    %84 = vmatpush2.msra.mxu0 0.0
    %85 = vmatprep.subr.mxu0 0.0
    %86 = vmatpush2.msra.mxu0 0.0
    %87 = vmatprep.subr.mxu0 0.0
    %88 = vmatpush2.msra.mxu0 0.0
    %89 = vmatprep.subr.mxu0 0.0
    %90 = vmatpush2.msra.mxu0 0.0
    %91 = vmatprep.subr.mxu0 0.0
    %92 = vmatpush2.msra.mxu0 0.0
    %93 = vmatprep.subr.mxu0 0.0
    %94 = vmatpush2.msra.mxu0 0.0
    %95 = vmatprep.subr.mxu0 0.0
    %96 = vmatpush2.msra.mxu0 0.0
    %97 = vmatprep.subr.mxu0 0.0
    %98 = vmatpush2.msra.mxu0 0.0
    %99 = vmatprep.mubr.f32.mxu0 0.0
    %100 = vmatmul.mubr.f32.gmra.mxu0 %v18
    %v101 = vpop.f32.mrf.mxu0
    %v102 = vadd.f32 0.0, %v101
    %v103 = vpop.f32.mrf.mxu0
    %104 = vdwg.mxu0
    %v105 = vtanh.pop %v102
    %v106 = vld [vmem:[%s2] sm:$0xff]
    %v107 = vld [vmem:[%s2 + $0x8] sm:$0xff]
    %v108 = vld [vmem:[%s2 + $0x10] sm:$0xff]
    %v109 = vld [vmem:[%s2 + $0x18] sm:$0xff]
    %v110 = vld [vmem:[%s2 + $0x20] sm:$0xff]
    %v111 = vld [vmem:[%s2 + $0x28] sm:$0xff]
    %v112 = vld [vmem:[%s2 + $0x30] sm:$0xff]
    %v113 = vld [vmem:[%s2 + $0x38] sm:$0xff]
    %v114 = vld [vmem:[%s2 + $0x40] sm:$0xff]
    %v115 = vld [vmem:[%s2 + $0x48] sm:$0xff]
    %v116 = vld [vmem:[%s2 + $0x50] sm:$0xff]
    %v117 = vld [vmem:[%s2 + $0x58] sm:$0xff]
    %v118 = vld [vmem:[%s2 + $0x60] sm:$0xff]
    %v119 = vld [vmem:[%s2 + $0x68] sm:$0xff]
    %v120 = vld [vmem:[%s2 + $0x70] sm:$0xff]
    %v121 = vld [vmem:[%s2 + $0x78] sm:$0xff]
    %122 = vmatprep.subr.mxu0 0.0
    %123 = vmatpush1.msra.mxu0 %v121
    %124 = vmatprep.subr.mxu0 0.0
    %125 = vmatpush1.msra.mxu0 %v120
    %126 = vmatprep.subr.mxu0 0.0
    %127 = vmatpush1.msra.mxu0 %v119
    %128 = vmatprep.subr.mxu0 0.0
    %129 = vmatpush1.msra.mxu0 %v118
    %130 = vmatprep.subr.mxu0 0.0
    %131 = vmatpush1.msra.mxu0 %v117
    %132 = vmatprep.subr.mxu0 0.0
    %133 = vmatpush1.msra.mxu0 %v116
    %134 = vmatprep.subr.mxu0 0.0
    %135 = vmatpush1.msra.mxu0 %v115
    %136 = vmatprep.subr.mxu0 0.0
    %137 = vmatpush1.msra.mxu0 %v114
    %138 = vmatprep.subr.mxu0 0.0
    %139 = vmatpush1.msra.mxu0 %v113
    %140 = vmatprep.subr.mxu0 0.0
    %141 = vmatpush1.msra.mxu0 %v112
    %142 = vmatprep.subr.mxu0 0.0
    %143 = vmatpush1.msra.mxu0 %v111
    %144 = vmatprep.subr.mxu0 0.0
    %145 = vmatpush1.msra.mxu0 %v110
    %146 = vmatprep.subr.mxu0 0.0
    %147 = vmatpush1.msra.mxu0 %v109
    %148 = vmatprep.subr.mxu0 0.0
    %149 = vmatpush1.msra.mxu0 %v108
    %150 = vmatprep.subr.mxu0 0.0
    %151 = vmatpush1.msra.mxu0 %v107
    %152 = vmatprep.subr.mxu0 0.0
    %153 = vmatpush1.msra.mxu0 %v106
    %154 = vmatprep.subr.mxu0 0.0
    %155 = vmatpush2.msra.mxu0 0.0
    %156 = vmatprep.subr.mxu0 0.0
    %157 = vmatpush2.msra.mxu0 0.0
    %158 = vmatprep.subr.mxu0 0.0
    %159 = vmatpush2.msra.mxu0 0.0
    %160 = vmatprep.subr.mxu0 0.0
    %161 = vmatpush2.msra.mxu0 0.0
    %162 = vmatprep.subr.mxu0 0.0
    %163 = vmatpush2.msra.mxu0 0.0
    %164 = vmatprep.subr.mxu0 0.0
    %165 = vmatpush2.msra.mxu0 0.0
    %166 = vmatprep.subr.mxu0 0.0
    %167 = vmatpush2.msra.mxu0 0.0
    %168 = vmatprep.subr.mxu0 0.0
    %169 = vmatpush2.msra.mxu0 0.0
    %170 = vmatprep.subr.mxu0 0.0
    %171 = vmatpush2.msra.mxu0 0.0
    %172 = vmatprep.subr.mxu0 0.0
    %173 = vmatpush2.msra.mxu0 0.0
    %174 = vmatprep.subr.mxu0 0.0
    %175 = vmatpush2.msra.mxu0 0.0
    %176 = vmatprep.subr.mxu0 0.0
    %177 = vmatpush2.msra.mxu0 0.0
    %178 = vmatprep.subr.mxu0 0.0
    %179 = vmatpush2.msra.mxu0 0.0
    %180 = vmatprep.subr.mxu0 0.0
    %181 = vmatpush2.msra.mxu0 0.0
    %182 = vmatprep.subr.mxu0 0.0
    %183 = vmatpush2.msra.mxu0 0.0
    %184 = vmatprep.subr.mxu0 0.0
    %185 = vmatpush2.msra.mxu0 0.0
    %186 = vmatprep.mubr.f32.mxu0 0.0
    %187 = vmatmul.mubr.f32.gmra.mxu0 %v105
    %v188 = vpop.f32.mrf.mxu0
    %v189 = vadd.f32 0.0, %v188
    %v190 = vpop.f32.mrf.mxu0
    %191 = vdwg.mxu0
    %v192 = vtanh.pop %v189
    %v193 = vld [vmem:[%s3] sm:$0xff]
    %v194 = vld [vmem:[%s3 + $0x8] sm:$0xff]
    %v195 = vld [vmem:[%s3 + $0x10] sm:$0xff]
    %v196 = vld [vmem:[%s3 + $0x18] sm:$0xff]
    %v197 = vld [vmem:[%s3 + $0x20] sm:$0xff]
    %v198 = vld [vmem:[%s3 + $0x28] sm:$0xff]
    %v199 = vld [vmem:[%s3 + $0x30] sm:$0xff]
    %v200 = vld [vmem:[%s3 + $0x38] sm:$0xff]
    %v201 = vld [vmem:[%s3 + $0x40] sm:$0xff]
    %v202 = vld [vmem:[%s3 + $0x48] sm:$0xff]
    %v203 = vld [vmem:[%s3 + $0x50] sm:$0xff]
    %v204 = vld [vmem:[%s3 + $0x58] sm:$0xff]
    %v205 = vld [vmem:[%s3 + $0x60] sm:$0xff]
    %v206 = vld [vmem:[%s3 + $0x68] sm:$0xff]
    %v207 = vld [vmem:[%s3 + $0x70] sm:$0xff]
    %v208 = vld [vmem:[%s3 + $0x78] sm:$0xff]
    %209 = vmatprep.subr.mxu0 0.0
    %210 = vmatpush1.msra.mxu0 %v208
    %211 = vmatprep.subr.mxu0 0.0
    %212 = vmatpush1.msra.mxu0 %v207
    %213 = vmatprep.subr.mxu0 0.0
    %214 = vmatpush1.msra.mxu0 %v206
    %215 = vmatprep.subr.mxu0 0.0
    %216 = vmatpush1.msra.mxu0 %v205
    %217 = vmatprep.subr.mxu0 0.0
    %218 = vmatpush1.msra.mxu0 %v204
    %219 = vmatprep.subr.mxu0 0.0
    %220 = vmatpush1.msra.mxu0 %v203
    %221 = vmatprep.subr.mxu0 0.0
    %222 = vmatpush1.msra.mxu0 %v202
    %223 = vmatprep.subr.mxu0 0.0
    %224 = vmatpush1.msra.mxu0 %v201
    %225 = vmatprep.subr.mxu0 0.0
    %226 = vmatpush1.msra.mxu0 %v200
    %227 = vmatprep.subr.mxu0 0.0
    %228 = vmatpush1.msra.mxu0 %v199
    %229 = vmatprep.subr.mxu0 0.0
    %230 = vmatpush1.msra.mxu0 %v198
    %231 = vmatprep.subr.mxu0 0.0
    %232 = vmatpush1.msra.mxu0 %v197
    %233 = vmatprep.subr.mxu0 0.0
    %234 = vmatpush1.msra.mxu0 %v196
    %235 = vmatprep.subr.mxu0 0.0
    %236 = vmatpush1.msra.mxu0 %v195
    %237 = vmatprep.subr.mxu0 0.0
    %238 = vmatpush1.msra.mxu0 %v194
    %239 = vmatprep.subr.mxu0 0.0
    %240 = vmatpush1.msra.mxu0 %v193
    %241 = vmatprep.subr.mxu0 0.0
    %242 = vmatpush2.msra.mxu0 0.0
    %243 = vmatprep.subr.mxu0 0.0
    %244 = vmatpush2.msra.mxu0 0.0
    %245 = vmatprep.subr.mxu0 0.0
    %246 = vmatpush2.msra.mxu0 0.0
    %247 = vmatprep.subr.mxu0 0.0
    %248 = vmatpush2.msra.mxu0 0.0
    %249 = vmatprep.subr.mxu0 0.0
    %250 = vmatpush2.msra.mxu0 0.0
    %251 = vmatprep.subr.mxu0 0.0
    %252 = vmatpush2.msra.mxu0 0.0
    %253 = vmatprep.subr.mxu0 0.0
    %254 = vmatpush2.msra.mxu0 0.0
    %255 = vmatprep.subr.mxu0 0.0
    %256 = vmatpush2.msra.mxu0 0.0
    %257 = vmatprep.subr.mxu0 0.0
    %258 = vmatpush2.msra.mxu0 0.0
    %259 = vmatprep.subr.mxu0 0.0
    %260 = vmatpush2.msra.mxu0 0.0
    %261 = vmatprep.subr.mxu0 0.0
    %262 = vmatpush2.msra.mxu0 0.0
    %263 = vmatprep.subr.mxu0 0.0
    %264 = vmatpush2.msra.mxu0 0.0
    %265 = vmatprep.subr.mxu0 0.0
    %266 = vmatpush2.msra.mxu0 0.0
    %267 = vmatprep.subr.mxu0 0.0
    %268 = vmatpush2.msra.mxu0 0.0
    %269 = vmatprep.subr.mxu0 0.0
    %270 = vmatpush2.msra.mxu0 0.0
    %271 = vmatprep.subr.mxu0 0.0
    %272 = vmatpush2.msra.mxu0 0.0
    %273 = vmatprep.mubr.f32.mxu0 0.0
    %274 = vmatmul.mubr.f32.gmra.mxu0 %v192
    %v275 = vpop.f32.mrf.mxu0
    %v276 = vadd.f32 0.0, %v275
    %v277 = vpop.f32.mrf.mxu0
    %278 = vdwg.mxu0
    %v279 = vtanh.pop %v276
    %280 = vst [vmem:[#allocation2] sm:$0xff] %v279
    // Predicated region
    $region18: #{net_forward.1} parent=1 // pred_check
      _
    $region19: #{net_forward.1} parent=1 // pred_check_branch
      %282 = sbr.rel (0) target = $region21
    $region20: #{net_forward.1} parent=1 // pred_region
      %s284 = ssub.s32 128, 128
      %285 = vsyncadd [#allocation3], %s284
      %s287 = sshll.u32 [#allocation2], 4
      %s288 = int_to_ptr.vmem [resolvable:$true] %s287
      %290 = dma.vmem_to_hbm [thread:$0]  %s288, 128, %s4, [#allocation3]
    $region21: #{net_forward.1} parent=1 // pred_fallthru
      _
    // Predicated region
    $region22: #{net_forward.1} parent=1 // pred_check
      _
    $region23: #{net_forward.1} parent=1 // pred_check_branch
      %292 = sbr.rel (0) target = $region25
    $region24: #{net_forward.1} parent=1 // pred_region
      %293 = dma.done [#allocation3], 128
    $region25: #{net_forward.1} parent=1 // pred_fallthru
      _
    %294 = vsyncpa [#allocation3], 1

</llo_original>
